<compile_context>
chip_gen: v5e
topology: v5e:2x2
jax: 0.10.0
libtpu: 0.0.40
codegen_flags: <defaults>
</compile_context>

<pallas_src>
import functools

import jax
import jax.numpy as jnp
from jax.experimental import pallas as pl
from jax.experimental.pallas import tpu as pltpu


# ----------------------------------------------------------------------------
# Fused path: one grid step handles `tb` whole samples (pool + excite + gate).
# ----------------------------------------------------------------------------
def se_fused_kernel(x_ref, w1_ref, w2_ref, o_ref, *, inv_hw):
    # x_ref: (tb, C, HW) native NCHW block;  w1_ref: (C, C//r);  w2_ref: (C//r, C)
    y = jnp.sum(x_ref[...], axis=-1, dtype=jnp.float32) * inv_hw          # (tb, C)
    h = jnp.maximum(
        jnp.dot(y, w1_ref[...], preferred_element_type=jnp.float32), 0.0)
    g = jax.nn.sigmoid(
        jnp.dot(h, w2_ref[...], preferred_element_type=jnp.float32))      # (tb, C)
    # Re-read x in its native dtype; cast only the tiny gate (no f32 x copy).
    o_ref[...] = x_ref[...] * g.astype(o_ref.dtype)[:, :, None]


# ----------------------------------------------------------------------------
# Two-pass path (large feature maps).
# ----------------------------------------------------------------------------
def se_pool_excite_kernel(x_ref, w1_ref, w2_ref, gate_ref, acc_ref,
                          *, inv_hw, hw, t_hw):
    # x_ref: (1, C, t_hw) spatial chunk   gate_ref: (1, C, 1)   acc_ref: (1, C)
    s = pl.program_id(1)

    @pl.when(s == 0)
    def _():
        acc_ref[...] = jnp.zeros_like(acc_ref)

    x = x_ref[...]
    if hw % t_hw != 0:  # static: a ragged last chunk exists -> mask OOB lanes
        lane = jax.lax.broadcasted_iota(jnp.int32, x.shape, 2)
        x = jnp.where(s * t_hw + lane < hw, x, 0)
    acc_ref[...] += jnp.sum(x, axis=-1, dtype=jnp.float32)                # (1, C)

    @pl.when(s == pl.num_programs(1) - 1)
    def _():
        y = acc_ref[...] * inv_hw                                         # (1, C)
        h = jnp.maximum(
            jnp.dot(y, w1_ref[...], preferred_element_type=jnp.float32), 0.0)
        g = jax.nn.sigmoid(
            jnp.dot(h, w2_ref[...], preferred_element_type=jnp.float32))
        gate_ref[...] = g[:, :, None]                                     # (1, C, 1)


def se_gate_kernel(x_ref, g_ref, o_ref):
    # x_ref: (1, C, t_hw)   g_ref: (1, C, 1) f32
    # Cast only the gate; multiply in x's native dtype.  OOB writes of the
    # ragged last chunk are dropped by Pallas.
    o_ref[...] = x_ref[...] * g_ref[...].astype(o_ref.dtype)


# ----------------------------------------------------------------------------
# Budget helpers
# ----------------------------------------------------------------------------
def _default_budgets():
    vmem_cap = 64 * 1024 * 1024          # conservative fallback (v7x physical)
    try:
        vmem_cap = int(pltpu.get_tpu_info().vmem_capacity_bytes)
    except Exception:
        pass
    vmem_limit = min(vmem_cap * 3 // 4, 100 * 1024 * 1024)
    # in + out, each double-buffered (= 4x tile) plus headroom.
    max_tile = vmem_limit // 5
    return max_tile, vmem_limit


def _pick_spatial_tile(budget_bytes, hw, lane_bytes):
    """Largest 128-lane-aligned spatial tile within `budget_bytes`."""
    t = (budget_bytes // max(lane_bytes, 1)) // 128 * 128
    t = max(t, 128)
    return hw if t >= hw else t          # full-dim block is always legal


# ----------------------------------------------------------------------------
# Wrapper
# ----------------------------------------------------------------------------
def se_layer(x, w1, w2, *, max_tile_bytes=None, vmem_limit_bytes=None):
    """x: (B, C, H, W); w1: (C//r, C), w2: (C, C//r) in PyTorch (out, in) layout."""
    b, c, h, w = x.shape
    hw = h * w
    dtype = x.dtype
    itemsize = jnp.dtype(dtype).itemsize
    c_red = w1.shape[0]

    d_tile, d_limit = _default_budgets()
    if max_tile_bytes is None:
        max_tile_bytes = d_tile
    if vmem_limit_bytes is None:
        vmem_limit_bytes = d_limit

    # Native NCHW layout as (B, C, HW): a free reshape (no HBM copy).
    x3 = x.reshape(b, c, hw)
    w1_t = w1.T                                            # (C, C//r)
    w2_t = w2.T                                            # (C//r, C)
    w_bytes = int((w1.size + w2.size) * jnp.dtype(w1.dtype).itemsize)

    sample_bytes = c * hw * itemsize

    if sample_bytes <= max_tile_bytes:
        # ---------------- fused single pass, grid over batch ----------------
        tb = min(b, max(1, max_tile_bytes // max(sample_bytes, 1)))
        if b >= 2:
            tb = min(tb, b // 2)         # >= 2 grid steps -> megacore on v7x
        while b % tb:
            tb -= 1
        cost = pl.CostEstimate(
            flops=int(2 * b * c * hw + 4 * b * c * c_red),
            transcendentals=int(b * c),
            bytes_accessed=int(2 * b * c * hw * itemsize + w_bytes))
        out3 = pl.pallas_call(
            functools.partial(se_fused_kernel, inv_hw=1.0 / hw),
            out_shape=jax.ShapeDtypeStruct((b, c, hw), dtype),
            grid=(b // tb,),
            in_specs=[
                pl.BlockSpec((tb, c, hw), lambda i: (i, 0, 0)),
                pl.BlockSpec(w1_t.shape, lambda i: (0, 0)),
                pl.BlockSpec(w2_t.shape, lambda i: (0, 0)),
            ],
            out_specs=pl.BlockSpec((tb, c, hw), lambda i: (i, 0, 0)),
            compiler_params=pltpu.CompilerParams(
                dimension_semantics=("parallel",),
                vmem_limit_bytes=vmem_limit_bytes),
            cost_estimate=cost,
        )(x3, w1_t, w2_t)
    else:
        # ------------- two passes: pool + excite, then gate ------------------
        lane_bytes = c * itemsize
        # Pass 1 has no large output block -> ~2x the gate-pass tile.
        t_hw_pool = _pick_spatial_tile(2 * max_tile_bytes, hw, lane_bytes)
        t_hw_gate = _pick_spatial_tile(max_tile_bytes, hw, lane_bytes)
        n_pool = pl.cdiv(hw, t_hw_pool)
        n_gate = pl.cdiv(hw, t_hw_gate)

        pool_cost = pl.CostEstimate(
            flops=int(b * c * hw + 4 * b * c * c_red),
            transcendentals=int(b * c),
            bytes_accessed=int(b * c * hw * itemsize + 4 * b * c + w_bytes))
        gate = pl.pallas_call(
            functools.partial(se_pool_excite_kernel,
                              inv_hw=1.0 / hw, hw=hw, t_hw=t_hw_pool),
            out_shape=jax.ShapeDtypeStruct((b, c, 1), jnp.float32),
            grid=(b, n_pool),
            in_specs=[
                pl.BlockSpec((1, c, t_hw_pool), lambda i, s: (i, 0, s)),
                pl.BlockSpec(w1_t.shape, lambda i, s: (0, 0)),
                pl.BlockSpec(w2_t.shape, lambda i, s: (0, 0)),
            ],
            out_specs=pl.BlockSpec((1, c, 1), lambda i, s: (i, 0, 0)),
            scratch_shapes=[pltpu.VMEM((1, c), jnp.float32)],
            compiler_params=pltpu.CompilerParams(
                dimension_semantics=("parallel", "arbitrary"),
                vmem_limit_bytes=vmem_limit_bytes),
            cost_estimate=pool_cost,
        )(x3, w1_t, w2_t)

        gate_cost = pl.CostEstimate(
            flops=int(b * c * hw),
            transcendentals=0,
            bytes_accessed=int(2 * b * c * hw * itemsize + 4 * b * c))
        out3 = pl.pallas_call(
            se_gate_kernel,
            out_shape=jax.ShapeDtypeStruct((b, c, hw), dtype),
            grid=(b, n_gate),
            in_specs=[
                pl.BlockSpec((1, c, t_hw_gate), lambda i, s: (i, 0, s)),
                pl.BlockSpec((1, c, 1), lambda i, s: (i, 0, 0)),
            ],
            out_specs=pl.BlockSpec((1, c, t_hw_gate), lambda i, s: (i, 0, s)),
            compiler_params=pltpu.CompilerParams(
                dimension_semantics=("parallel", "parallel"),
                vmem_limit_bytes=vmem_limit_bytes),
            cost_estimate=gate_cost,
        )(x3, gate)

    return out3.reshape(b, c, h, w)


def reference_se_layer(x, w1, w2):
    y = x.mean(axis=(2, 3))                         # (B, C)
    y = jnp.maximum(y @ w1.T, 0.0)                  # (B, C//r)
    y = jax.nn.sigmoid(y @ w2.T)                    # (B, C)
    return x * y[:, :, None, None]


if __name__ == "__main__":
    key = jax.random.PRNGKey(0)

    def run_case(b, c, h, w, reduction=1, **kwargs):
        c_red = c // reduction
        kx, k1, k2 = jax.random.split(jax.random.fold_in(key, b * 1000 + h + w), 3)
        x = jax.random.normal(kx, (b, c, h, w), dtype=jnp.float32)
        # PyTorch Linear layout: (out_features, in_features), bias-free.
        w1 = jax.random.normal(k1, (c_red, c), dtype=jnp.float32) * 0.5
        w2 = jax.random.normal(k2, (c, c_red), dtype=jnp.float32) * 0.5
        out = se_layer(x, w1, w2, **kwargs)
        jax.block_until_ready(out)
        ref = reference_se_layer(x, w1, w2)
        assert out.shape == x.shape
        assert jnp.allclose(out, ref, atol=1e-5, rtol=1e-5), (
            f"mismatch for shape {(b, c, h, w)} kwargs={kwargs}")

    # Fused single-pass path (whole samples fit the tile budget; grid of 2
    # batch steps so megacore sharding can engage).
    run_case(2, 4, 16, 16)

    # Two-pass path (pool+excite then gate) forced via a tiny tile budget;
    # 128-lane spatial chunks, accumulator init/finalize via pl.when.
    run_case(2, 4, 16, 16, max_tile_bytes=2048)

    # Two-pass path with a ragged last spatial chunk (HW=288 not % 128):
    # exercises the iota mask in the pool pass and dropped OOB writes in the
    # gate pass (no jnp.pad / slice copies).
    run_case(2, 8, 16, 18, max_tile_bytes=4096)

    print("KERNEL_OK")
</pallas_src>

<mosaic_0001>
module attributes {stable_mosaic.version = 11 : i64} {
  func.func @se_fused_kernel(%arg0: i32, %arg1: memref<1x4x256xf32, #tpu.memory_space<vmem>>, %arg2: memref<4x4xf32, #tpu.memory_space<vmem>>, %arg3: memref<4x4xf32, #tpu.memory_space<vmem>>, %arg4: memref<1x4x256xf32, #tpu.memory_space<vmem>>) attributes {dimension_semantics = [#tpu.dimension_semantics<parallel>], iteration_bounds = array<i64: 2>, scalar_prefetch = 0 : i64, scratch_operands = 0 : i64, tpu.core_type = #tpu.core_type<tc>, window_params = [{transform_indices = @transform_0, window_bounds = array<i64: 1, 4, 256>}, {pipeline_mode = #tpu.pipeline_mode<synchronous>, transform_indices = @transform_1, window_bounds = array<i64: 4, 4>}, {pipeline_mode = #tpu.pipeline_mode<synchronous>, transform_indices = @transform_2, window_bounds = array<i64: 4, 4>}, {transform_indices = @transform_3, window_bounds = array<i64: 1, 4, 256>}]} {
    %c0 = arith.constant 0 : index
    %c0_0 = arith.constant 0 : index
    %c0_1 = arith.constant 0 : index
    %0 = vector.load %arg1[%c0, %c0_0, %c0_1] : memref<1x4x256xf32, #tpu.memory_space<vmem>>, vector<1x4x256xf32>
    %cst = arith.constant dense<0.000000e+00> : vector<1x4xf32>
    %1 = vector.multi_reduction <add>, %0, %cst [2] : vector<1x4x256xf32> to vector<1x4xf32>
    %cst_2 = arith.constant 3.906250e-03 : f32
    %2 = vector.broadcast %cst_2 : f32 to vector<1x4xf32>
    %3 = arith.mulf %1, %2 : vector<1x4xf32>
    %c0_3 = arith.constant 0 : index
    %c0_4 = arith.constant 0 : index
    %4 = vector.load %arg2[%c0_3, %c0_4] : memref<4x4xf32, #tpu.memory_space<vmem>>, vector<4x4xf32>
    %cst_5 = arith.constant dense<0.000000e+00> : vector<1x4xf32>
    %5 = tpu.matmul %3, %4, %cst_5 {dimension_numbers = #tpu.dot_dimension_numbers<[1], [0], [0], [1], [0, 0, 1, 1], [], []>} : vector<1x4xf32>, vector<4x4xf32>, vector<1x4xf32> -> vector<1x4xf32>
    %cst_6 = arith.constant 0.000000e+00 : f32
    %6 = vector.broadcast %cst_6 : f32 to vector<1x4xf32>
    %7 = arith.maximumf %5, %6 : vector<1x4xf32>
    %c0_7 = arith.constant 0 : index
    %c0_8 = arith.constant 0 : index
    %8 = vector.load %arg3[%c0_7, %c0_8] : memref<4x4xf32, #tpu.memory_space<vmem>>, vector<4x4xf32>
    %cst_9 = arith.constant dense<0.000000e+00> : vector<1x4xf32>
    %9 = tpu.matmul %7, %8, %cst_9 {dimension_numbers = #tpu.dot_dimension_numbers<[1], [0], [0], [1], [0, 0, 1, 1], [], []>} : vector<1x4xf32>, vector<4x4xf32>, vector<1x4xf32> -> vector<1x4xf32>
    %10 = arith.negf %9 : vector<1x4xf32>
    %11 = math.exp %10 : vector<1x4xf32>
    %cst_10 = arith.constant 1.000000e+00 : f32
    %12 = vector.broadcast %cst_10 : f32 to vector<1x4xf32>
    %13 = arith.addf %12, %11 : vector<1x4xf32>
    %14 = arith.divf %12, %13 : vector<1x4xf32>
    %c0_11 = arith.constant 0 : index
    %c0_12 = arith.constant 0 : index
    %c0_13 = arith.constant 0 : index
    %15 = vector.load %arg1[%c0_11, %c0_12, %c0_13] : memref<1x4x256xf32, #tpu.memory_space<vmem>>, vector<1x4x256xf32>
    %16 = vector.shape_cast %14 : vector<1x4xf32> to vector<1x4x1xf32>
    %17 = vector.broadcast %16 : vector<1x4x1xf32> to vector<1x4x256xf32>
    %18 = arith.mulf %15, %17 : vector<1x4x256xf32>
    %c0_14 = arith.constant 0 : index
    %c0_15 = arith.constant 0 : index
    %c0_16 = arith.constant 0 : index
    %19 = vector.load %arg4[%c0_14, %c0_15, %c0_16] : memref<1x4x256xf32, #tpu.memory_space<vmem>>, vector<1x4x256xf32>
    tpu.vector_store %arg4[%c0_14, %c0_15, %c0_16], %18 {strides = array<i32>} : memref<1x4x256xf32, #tpu.memory_space<vmem>>, vector<1x4x256xf32>,
    return
  }
  func.func @transform_0(%arg0: i32) -> (i32, i32, i32) {
    %c0_i32 = arith.constant 0 : i32
    %c0_i32_0 = arith.constant 0 : i32
    %c0_i32_1 = arith.constant 0 : i32
    return %arg0, %c0_i32, %c0_i32_0 : i32, i32, i32
  }
  func.func @transform_1(%arg0: i32) -> (i32, i32) {
    %c0_i32 = arith.constant 0 : i32
    %c0_i32_0 = arith.constant 0 : i32
    %c0_i32_1 = arith.constant 0 : i32
    return %c0_i32, %c0_i32_0 : i32, i32
  }
  func.func @transform_2(%arg0: i32) -> (i32, i32) {
    %c0_i32 = arith.constant 0 : i32
    %c0_i32_0 = arith.constant 0 : i32
    %c0_i32_1 = arith.constant 0 : i32
    return %c0_i32, %c0_i32_0 : i32, i32
  }
  func.func @transform_3(%arg0: i32) -> (i32, i32, i32) {
    %c0_i32 = arith.constant 0 : i32
    %c0_i32_0 = arith.constant 0 : i32
    %c0_i32_1 = arith.constant 0 : i32
    return %arg0, %c0_i32, %c0_i32_0 : i32, i32, i32
  }
}

</mosaic_0001>

<llo_original>
// kernel: tpu_custom_call.1
$region0: #{tpu_custom_call.1}
  #allocation0 [shape = 'u32[]', space=smem, size = 0x4, offset = 0x4, fixed_abs, tag = 'smem constant byte address 0x4 - core index']
  #allocation1 [shape = 'u32[72,128]{1,0:T(1,128)}', space=vmem, size = 0x9000, scoped, tag = 'internal scratch']
  %s0 = inlined_call_operand.hbm [shape: f32[2,4,256], index: 0, kind: input, shape index: {}]
  %s1 = inlined_call_operand.hbm [shape: f32[4,4], index: 1, kind: input, shape index: {}]
  %s2 = inlined_call_operand.hbm [shape: f32[4,4], index: 2, kind: input, shape index: {}]
  %s3 = inlined_call_operand.hbm [shape: f32[2,4,256], index: 3, kind: output, shape index: {}]
  %s4 = sld [smem:[#allocation0]]
  $region57: #{tpu_custom_call.1} parent=0
    _
  %s6 = ssub.s32 1, %s4
  %s7 = scalar_select 0, %s6, %s4
  $region1: #{tpu_custom_call.1} parent=0
    #allocation2 [shape = 'u8[8192]{0}', space=vmem, size = 0x2000, scoped, tag = 'input window, operand 0']
    #allocation3 [shape = 's32[2]{0}', space=sflag, size = 0x8, scoped, tag = 'scoped memory for tpu_custom_call.1']
    #allocation4 [shape = 's32[2]{0}', space=sflag, size = 0x8, scoped, tag = 'scoped memory for tpu_custom_call.1']
    #allocation5 [shape = 'u8[2048]{0}', space=vmem, size = 0x800, scoped, tag = 'input window, operand 1, single buffered']
    #allocation6 [shape = 's32[1]{0}', space=sflag, size = 0x4, scoped, tag = 'scoped memory for tpu_custom_call.1']
    #allocation7 [shape = 'u8[2048]{0}', space=vmem, size = 0x800, scoped, tag = 'input window, operand 2, single buffered']
    #allocation8 [shape = 'u8[8192]{0}', space=vmem, size = 0x2000, scoped, tag = 'output window, operand 0']
    %8 = vsyncpa [#allocation3], 0
    %s9 = scalar_lea.sflag [#allocation3], 1
    %10 = vsyncpa %s9, 0
    %11 = vsyncpa [#allocation6], 0
    %12 = vsyncpa [#allocation4], 0
    %s13 = scalar_lea.sflag [#allocation4], 1
    %14 = vsyncpa %s13, 0
    loop: start=0, step=1, limit=4
    $region2: #{tpu_custom_call.1} parent=1 // loop_pre_header
      _
    $region3: #{tpu_custom_call.1} parent=1 // loop_header
      %s16 = sphi 0, %s20
      %p17 = scmp.ge.s32.totalorder %s16, 4
      %s26 = sphi 0, %s28
      %s29 = sphi 0, %s26
      %s30 = sphi 0, %s29
      %s46 = sphi 0, %s30
      %s50 = sphi 0, %s50
      %s52 = sphi 0, %s50
      %s53 = sphi 0, %s52
      %s67 = sphi 0, %s53
      %s71 = sphi 0, %s71
      %s73 = sphi 0, %s71
      %s74 = sphi 0, %s73
      %s88 = sphi 0, %s74
      %s94 = sphi 0, %s96
      %s97 = sphi 0, %s94
      %s98 = sphi 0, %s97
      %s114 = sphi 0, %s98
    $region4: #{tpu_custom_call.1} parent=1 // loop_header_branch
      %19 = sbr.rel (%p17) target = $region8
    $region5: #{tpu_custom_call.1} parent=1 // loop_body
      %s21 = ssub.s32 %s16, 1
      %s22 = ssub.s32 %s16, 2
      %s23 = sadd.s32 %s16, 1
      %s24 = ssub.s32 %s16, %s23
      %p25 = scmp.eq.s32.totalorder %s24, 0
      %s27 = sadd.s32 %s26, 1
      %s28 = scalar_select %p25, %s26, %s27
      %p31 = pneg %p25
      %p32 = scmp.eq.s32.totalorder %s16, 1
      %p33 = por %p31, %p32
      %p34 = scmp.ne.s32.totalorder %s26, %s29
      %p35 = scmp.eq.s32.totalorder %s16, 0
      %p36 = por %p34, %p35
      %p37 = scmp.ne.s32.totalorder %s26, %s29
      %p38 = scmp.eq.s32.totalorder %s21, 1
      %p39 = por %p37, %p38
      %p40 = scmp.ne.s32.totalorder %s29, %s30
      %p41 = scmp.eq.s32.totalorder %s21, 0
      %p42 = por %p40, %p41
      %p43 = scmp.ne.s32.totalorder %s29, %s30
      %p44 = scmp.eq.s32.totalorder %s22, 1
      %p45 = por %p43, %p44
      %p47 = scmp.ne.s32.totalorder %s30, %s46
      %p48 = scmp.eq.s32.totalorder %s22, 0
      %p49 = por %p47, %p48
      %s51 = sadd.s32 %s50, 1
      %p54 = scmp.eq.s32.totalorder %s16, 1
      %p55 = scmp.ne.s32.totalorder %s50, %s52
      %p56 = scmp.eq.s32.totalorder %s16, 0
      %p57 = por %p55, %p56
      %p58 = scmp.ne.s32.totalorder %s50, %s52
      %p59 = scmp.eq.s32.totalorder %s21, 1
      %p60 = por %p58, %p59
      %p61 = scmp.ne.s32.totalorder %s52, %s53
      %p62 = scmp.eq.s32.totalorder %s21, 0
      %p63 = por %p61, %p62
      %p64 = scmp.ne.s32.totalorder %s52, %s53
      %p65 = scmp.eq.s32.totalorder %s22, 1
      %p66 = por %p64, %p65
      %p68 = scmp.ne.s32.totalorder %s53, %s67
      %p69 = scmp.eq.s32.totalorder %s22, 0
      %p70 = por %p68, %p69
      %s72 = sadd.s32 %s71, 1
      %p75 = scmp.eq.s32.totalorder %s16, 1
      %p76 = scmp.ne.s32.totalorder %s71, %s73
      %p77 = scmp.eq.s32.totalorder %s16, 0
      %p78 = por %p76, %p77
      %p79 = scmp.ne.s32.totalorder %s71, %s73
      %p80 = scmp.eq.s32.totalorder %s21, 1
      %p81 = por %p79, %p80
      %p82 = scmp.ne.s32.totalorder %s73, %s74
      %p83 = scmp.eq.s32.totalorder %s21, 0
      %p84 = por %p82, %p83
      %p85 = scmp.ne.s32.totalorder %s73, %s74
      %p86 = scmp.eq.s32.totalorder %s22, 1
      %p87 = por %p85, %p86
      %p89 = scmp.ne.s32.totalorder %s74, %s88
      %p90 = scmp.eq.s32.totalorder %s22, 0
      %p91 = por %p89, %p90
      %s92 = ssub.s32 %s16, %s23
      %p93 = scmp.eq.s32.totalorder %s92, 0
      %s95 = sadd.s32 %s94, 1
      %s96 = scalar_select %p93, %s94, %s95
      %p99 = pneg %p93
      %p100 = scmp.eq.s32.totalorder %s16, 1
      %p101 = por %p99, %p100
      %p102 = scmp.ne.s32.totalorder %s94, %s97
      %p103 = scmp.eq.s32.totalorder %s16, 0
      %p104 = por %p102, %p103
      %p105 = scmp.ne.s32.totalorder %s94, %s97
      %p106 = scmp.eq.s32.totalorder %s21, 1
      %p107 = por %p105, %p106
      %p108 = scmp.ne.s32.totalorder %s97, %s98
      %p109 = scmp.eq.s32.totalorder %s21, 0
      %p110 = por %p108, %p109
      %p111 = scmp.ne.s32.totalorder %s97, %s98
      %p112 = scmp.eq.s32.totalorder %s22, 1
      %p113 = por %p111, %p112
      %p115 = scmp.ne.s32.totalorder %s98, %s114
      %p116 = scmp.eq.s32.totalorder %s22, 0
      %p117 = por %p115, %p116
      %p118 = scmp.le.s32.totalorder 1, %s16
      %p119 = scmp.lt.s32.totalorder %s16, 3
      %p120 = pnand %p118, %p119
      %p121 = pneg %p120
      // Predicated region
      $region9: #{tpu_custom_call.1} parent=5 // pred_check
        _
      $region10: #{tpu_custom_call.1} parent=5 // pred_check_branch
        %123 = sbr.rel (%p120) target = $region12
      $region11: #{tpu_custom_call.1} parent=5 // pred_region
        %s124 = ssub.s32 %s16, 1
        // Predicated region
        $region13: #{tpu_custom_call.1} parent=11 // pred_check
          %p125 = pneg %p63
        $region14: #{tpu_custom_call.1} parent=11 // pred_check_branch
          %127 = sbr.rel (%p125) target = $region16
        $region15: #{tpu_custom_call.1} parent=11 // pred_region
          %129 = vsyncadd [#allocation6], 0
          %s131 = sshll.u32 %s1, 4
          %s132 = int_to_ptr.hbm [resolvable:$true] %s131
          %s133 = sshll.u32 [#allocation5], 4
          %s134 = int_to_ptr.vmem [resolvable:$true] %s133
          %136 = dma.hbm_to_vmem [thread:$0]  %s132, 64, %s134, [#allocation6]
        $region16: #{tpu_custom_call.1} parent=11 // pred_fallthru
          _
        // Predicated region
        $region17: #{tpu_custom_call.1} parent=11 // pred_check
          %p137 = pneg %p84
        $region18: #{tpu_custom_call.1} parent=11 // pred_check_branch
          %139 = sbr.rel (%p137) target = $region20
        $region19: #{tpu_custom_call.1} parent=11 // pred_region
          %141 = vsyncadd [#allocation6], 0
          %s143 = sshll.u32 %s2, 4
          %s144 = int_to_ptr.hbm [resolvable:$true] %s143
          %s145 = sshll.u32 [#allocation7], 4
          %s146 = int_to_ptr.vmem [resolvable:$true] %s145
          %148 = dma.hbm_to_vmem [thread:$0]  %s144, 64, %s146, [#allocation6]
        $region20: #{tpu_custom_call.1} parent=11 // pred_fallthru
          _
      $region12: #{tpu_custom_call.1} parent=5 // pred_fallthru
        _
      %p149 = scmp.lt.s32.totalorder %s16, 2
      // Predicated region
      $region21: #{tpu_custom_call.1} parent=5 // pred_check
        %p150 = pneg %p149
      $region22: #{tpu_custom_call.1} parent=5 // pred_check_branch
        %152 = sbr.rel (%p150) target = $region24
      $region23: #{tpu_custom_call.1} parent=5 // pred_region
        // Predicated region
        $region25: #{tpu_custom_call.1} parent=23 // pred_check
          %p153 = pneg %p36
        $region26: #{tpu_custom_call.1} parent=23 // pred_check_branch
          %155 = sbr.rel (%p153) target = $region28
        $region27: #{tpu_custom_call.1} parent=23 // pred_region
          %s156 = sand.u32 %s26, 1
          %s157 = scalar_lea.sflag [#allocation3], %s156
          %s158 = sand.u32 %s26, 1
          %s159 = smul.addr %s158, 8
          %s160 = scalar_lea.vmem [#allocation2], %s159
          %162 = vsyncadd %s157, 0
          %s163 = smul.addr %s16, 2
          %s164 = smul.addr %s163, 4
          %s165 = scalar_lea.hbm %s0, %s164
          %s167 = sshll.u32 %s165, 4
          %s168 = int_to_ptr.hbm [resolvable:$true] %s167
          %s169 = sshll.u32 %s160, 4
          %s170 = int_to_ptr.vmem [resolvable:$true] %s169
          %172 = dma.hbm_to_vmem [thread:$0]  %s168, 128, %s170, %s157
        $region28: #{tpu_custom_call.1} parent=23 // pred_fallthru
          _
      $region24: #{tpu_custom_call.1} parent=5 // pred_fallthru
        _
      %p173 = scmp.le.s32.totalorder 1, %s16
      %p174 = scmp.lt.s32.totalorder %s16, 3
      %p175 = pnand %p173, %p174
      %p176 = pneg %p175
      // Predicated region
      $region29: #{tpu_custom_call.1} parent=5 // pred_check
        _
      $region30: #{tpu_custom_call.1} parent=5 // pred_check_branch
        %178 = sbr.rel (%p175) target = $region32
      $region31: #{tpu_custom_call.1} parent=5 // pred_region
        %s179 = ssub.s32 %s16, 1
        %s180 = sand.u32 %s29, 1
        %s181 = scalar_lea.sflag [#allocation3], %s180
        %s182 = sand.u32 %s29, 1
        %s183 = smul.addr %s182, 8
        %s184 = scalar_lea.vmem [#allocation2], %s183
        // Predicated region
        $region33: #{tpu_custom_call.1} parent=31 // pred_check
          %p185 = pneg %p42
        $region34: #{tpu_custom_call.1} parent=31 // pred_check_branch
          %187 = sbr.rel (%p185) target = $region36
        $region35: #{tpu_custom_call.1} parent=31 // pred_region
          %189 = dma.done %s181, 128
        $region36: #{tpu_custom_call.1} parent=31 // pred_fallthru
          _
        // Predicated region
        $region37: #{tpu_custom_call.1} parent=31 // pred_check
          %p190 = pneg %p63
        $region38: #{tpu_custom_call.1} parent=31 // pred_check_branch
          %192 = sbr.rel (%p190) target = $region40
        $region39: #{tpu_custom_call.1} parent=31 // pred_region
          %194 = dma.done [#allocation6], 64
        $region40: #{tpu_custom_call.1} parent=31 // pred_fallthru
          _
        // Predicated region
        $region41: #{tpu_custom_call.1} parent=31 // pred_check
          %p195 = pneg %p84
        $region42: #{tpu_custom_call.1} parent=31 // pred_check_branch
          %197 = sbr.rel (%p195) target = $region44
        $region43: #{tpu_custom_call.1} parent=31 // pred_region
          %199 = dma.done [#allocation6], 64
        $region44: #{tpu_custom_call.1} parent=31 // pred_fallthru
          _
        %s200 = sand.u32 %s29, 1
        %s201 = scalar_lea.sflag [#allocation3], %s200
        %s202 = sand.u32 %s29, 1
        %s203 = smul.addr %s202, 8
        %s204 = scalar_lea.vmem [#allocation2], %s203
        %p205 = pneg %p42
        %p206 = pneg %p39
        %p207 = pneg %p63
        %p208 = pneg %p60
        %p209 = pneg %p84
        %p210 = pneg %p81
        %p211 = pneg %p110
        %p212 = pneg %p107
        %s213 = sand.u32 %s97, 1
        %s214 = scalar_lea.sflag [#allocation4], %s213
        %s215 = sand.u32 %s97, 1
        %s216 = smul.addr %s215, 8
        %s217 = scalar_lea.vmem [#allocation8], %s216
        %v218 = vld [vmem:[%s184] sm:$0xff]
        %220 = vst [vmem:[#allocation1] ss:$2 sm:$0xff] %v218
        %v221 = vld.sshfl [vmem:[#allocation1] sm:$0xff pattern:$0x75316420]
        %v222 = vld.sshfl [vmem:[#allocation1 + $0x8] sm:$0xff pattern:$0x75316420]
        %vm225 = vcmask 1043456
        %v226 = vsel %vm225, %v221, 0.0
        %v227 = vsel %vm225, %v222, 0.0
        %v228 = vadd.f32 %v226, %v227
        %229 = vadd.xlane.f32.xlu0 %v228
        %v230 = vpop.xlane.xlu0 %229
        %v231 = vmul.f32 %v230, 0.00390625
        %v232 = vld [vmem:[#allocation5] sm:$0xf]
        %v234 = vlaneseq
        %v235 = vand.u32 %v234, 127
        %v236 = vperm.slane %v231, %v235
        %vm237 = vcmask 31744
        %v238 = vsel %vm237, %v236, 0
        %v241 = vsel %vm225, %v232, 0
        %243 = vmatpush.msra.mxu0 0.0
        %244 = vmatpush.msra.mxu0 0.0
        %245 = vmatpush.msra.mxu0 0.0
        %246 = vmatpush.msra.mxu0 0.0
        %247 = vmatpush.msra.mxu0 0.0
        %248 = vmatpush.msra.mxu0 0.0
        %249 = vmatpush.msra.mxu0 0.0
        %250 = vmatpush.msra.mxu0 0.0
        %251 = vmatpush.msra.mxu0 0.0
        %252 = vmatpush.msra.mxu0 0.0
        %253 = vmatpush.msra.mxu0 0.0
        %254 = vmatpush.msra.mxu0 0.0
        %255 = vmatpush.msra.mxu0 0.0
        %256 = vmatpush.msra.mxu0 0.0
        %257 = vmatpush.msra.mxu0 0.0
        %258 = vmatpush.msra.mxu0 %v241
        %259 = vmatmul.f32.gmra.mxu0 %v238
        %v260 = vpop.f32.mrf.mxu0
        %v261 = vadd.f32 0.0, %v260
        %262 = vdwg.mxu0
        %v263 = vmax.f32 %v261, 0.0
        %v264 = vld [vmem:[#allocation7] sm:$0xf]
        %v266 = vsel %vm237, %v263, 0
        %v269 = vsel %vm225, %v264, 0
        %271 = vmatpush.msra.mxu0 0.0
        %272 = vmatpush.msra.mxu0 0.0
        %273 = vmatpush.msra.mxu0 0.0
        %274 = vmatpush.msra.mxu0 0.0
        %275 = vmatpush.msra.mxu0 0.0
        %276 = vmatpush.msra.mxu0 0.0
        %277 = vmatpush.msra.mxu0 0.0
        %278 = vmatpush.msra.mxu0 0.0
        %279 = vmatpush.msra.mxu0 0.0
        %280 = vmatpush.msra.mxu0 0.0
        %281 = vmatpush.msra.mxu0 0.0
        %282 = vmatpush.msra.mxu0 0.0
        %283 = vmatpush.msra.mxu0 0.0
        %284 = vmatpush.msra.mxu0 0.0
        %285 = vmatpush.msra.mxu0 0.0
        %286 = vmatpush.msra.mxu0 %v269
        %287 = vmatmul.f32.gmra.mxu0 %v266
        %v288 = vpop.f32.mrf.mxu0
        %v289 = vadd.f32 0.0, %v288
        %290 = vdwg.mxu0
        %v291 = vxor.u32 %v289, 2147483648
        %v292 = vmul.f32 %v291, 1.442695
        %v293 = vpow.pop %v292
        %v294 = vadd.f32 %v293, 1.0
        %v295 = vrcp.pop %v294
        %v296 = vmul.f32 %v294, %v295
        %v297 = vsub.f32 1.0, %v296
        %v298 = vmul.f32 %v295, %v297
        %v299 = vadd.f32 %v295, %v298
        %vm300 = vweird.f32 %v294
        %vm301 = vweird.f32 %v295
        %vm302 = vmor %vm300, %vm301
        %v303 = vsel %vm302, %v295, %v299
        %v304 = vand.u32 2147483647, %v294
        %vm305 = vcmp.eq.f32.partialorder %v304, 8.507059e+37
        %v306 = vand.u32 %v294, 2147483648
        %v307 = vor.u32 1.1754944e-38, %v306
        %v308 = vsel %vm305, %v307, %v303
        %v309 = vmul.f32 1.0, %v308
        %v310 = vperm.slane %v309, 0
        %v311 = vlaneseq
        %v312 = vshrl.u32 %v311, 7
        %314 = vset.pattern.permute.xlu0 %v312
        %315 = vperm.xlu0 %314, %v310
        %v316 = vpop.permute.xlu0 %315
        %v319 = vunpack.c.l.s4 839922192
        %v320 = vunpack.c.0.s8 %v319
        %v321 = vperm.slane %v316, %v320
        %v323 = vmul.f32 %v218, %v321
        %324 = vst [vmem:[%s217] sm:$0xff] %v323
        %s325 = sand.u32 %s97, 1
        %s326 = scalar_lea.sflag [#allocation4], %s325
        %s327 = sand.u32 %s97, 1
        %s328 = smul.addr %s327, 8
        %s329 = scalar_lea.vmem [#allocation8], %s328
        // Predicated region
        $region45: #{tpu_custom_call.1} parent=31 // pred_check
          %p330 = pneg %p107
        $region46: #{tpu_custom_call.1} parent=31 // pred_check_branch
          %332 = sbr.rel (%p330) target = $region48
        $region47: #{tpu_custom_call.1} parent=31 // pred_region
          %334 = vsyncadd %s326, 0
          %s335 = smul.addr %s21, 2
          %s336 = smul.addr %s335, 4
          %s337 = scalar_lea.hbm %s3, %s336
          %s339 = sshll.u32 %s329, 4
          %s340 = int_to_ptr.vmem [resolvable:$true] %s339
          %s341 = sshll.u32 %s337, 4
          %s342 = int_to_ptr.hbm [resolvable:$true] %s341
          %344 = dma.vmem_to_hbm [thread:$0]  %s340, 128, %s342, %s326
        $region48: #{tpu_custom_call.1} parent=31 // pred_fallthru
          _
      $region32: #{tpu_custom_call.1} parent=5 // pred_fallthru
        _
      %p345 = scmp.le.s32.totalorder 2, %s16
      // Predicated region
      $region49: #{tpu_custom_call.1} parent=5 // pred_check
        %p346 = pneg %p345
      $region50: #{tpu_custom_call.1} parent=5 // pred_check_branch
        %348 = sbr.rel (%p346) target = $region52
      $region51: #{tpu_custom_call.1} parent=5 // pred_region
        %s349 = ssub.s32 %s16, 2
        // Predicated region
        $region53: #{tpu_custom_call.1} parent=51 // pred_check
          %p350 = pneg %p113
        $region54: #{tpu_custom_call.1} parent=51 // pred_check_branch
          %352 = sbr.rel (%p350) target = $region56
        $region55: #{tpu_custom_call.1} parent=51 // pred_region
          %s353 = sand.u32 %s98, 1
          %s354 = scalar_lea.sflag [#allocation4], %s353
          %s355 = sand.u32 %s98, 1
          %s356 = smul.addr %s355, 8
          %s357 = scalar_lea.vmem [#allocation8], %s356
          %359 = dma.done %s354, 128
        $region56: #{tpu_custom_call.1} parent=51 // pred_fallthru
          _
      $region52: #{tpu_custom_call.1} parent=5 // pred_fallthru
        _
    $region6: #{tpu_custom_call.1} parent=1 // loop_footer
      %s20 = sadd.s32 1, %s16
    $region7: #{tpu_custom_call.1} parent=1 // loop_footer_branch
      %15 = sbr.rel target = $region3
    $region8: #{tpu_custom_call.1} parent=1 // loop_exit
      _
    %360 = vsyncpa [#allocation3], 1
    %s361 = scalar_lea.sflag [#allocation3], 1
    %362 = vsyncpa %s361, 1
    %363 = vsyncpa [#allocation6], 1
    %364 = vsyncpa [#allocation4], 1
    %s365 = scalar_lea.sflag [#allocation4], 1
    %366 = vsyncpa %s365, 1

</llo_original>
